<compile_context>
chip_gen: v6e
topology: v6e:2x2x1
jax: 0.10.0
libtpu: 0.0.40
codegen_flags: <defaults>
</compile_context>

<pallas_src>
import functools
import math

import jax
import jax.numpy as jnp
from jax.experimental import pallas as pl
from jax.experimental.pallas import tpu as pltpu


# ---------------------------------------------------------------------------
# helpers
# ---------------------------------------------------------------------------
def find_multiple(n, k):
    if n % k == 0:
        return n
    return n + k - (n % k)


def _pick_tile(dim, candidates):
    for c in candidates:
        if c <= dim and dim % c == 0:
            return c
    return dim  # full-dim block is always legal


# ---------------------------------------------------------------------------
# Tiled linear  y = x @ w_t + b  (bf16 MXU operands, fp32 accumulation)
# ---------------------------------------------------------------------------
def _linear_kernel(x_ref, w_ref, b_ref, o_ref, acc_ref):
    @pl.when(pl.program_id(2) == 0)
    def _():
        acc_ref[...] = jnp.zeros(acc_ref.shape, jnp.float32)

    acc_ref[...] += jnp.dot(x_ref[...], w_ref[...],
                            preferred_element_type=jnp.float32)

    @pl.when(pl.program_id(2) == pl.num_programs(2) - 1)
    def _():
        o_ref[...] = (acc_ref[...] + b_ref[...]).astype(o_ref.dtype)


def linear(x2d, w_t, b_row, out_dtype):
    """y = x2d @ w_t + b_row.  w_t: (K, N) bf16, b_row: (1, N) f32."""
    x2d = x2d.astype(jnp.bfloat16)          # cast once in the wrapper (review item)
    M, K = x2d.shape
    K2, N = w_t.shape
    assert K2 == K
    tm = _pick_tile(M, (512, 256, 128, 64, 32, 16, 8))
    tn = _pick_tile(N, (512, 256, 128))
    tk = _pick_tile(K, (512, 256, 128))
    out_bytes = jnp.dtype(out_dtype).itemsize
    cost = pl.CostEstimate(
        flops=2 * M * N * K,
        transcendentals=0,
        bytes_accessed=M * K * 2 + K * N * 2 + M * N * out_bytes + N * 4,
    )
    return pl.pallas_call(
        _linear_kernel,
        out_shape=jax.ShapeDtypeStruct((M, N), out_dtype),
        grid=(M // tm, N // tn, K // tk),
        in_specs=[
            pl.BlockSpec((tm, tk), lambda i, j, k: (i, k)),
            pl.BlockSpec((tk, tn), lambda i, j, k: (k, j)),
            pl.BlockSpec((1, tn), lambda i, j, k: (0, j)),
        ],
        out_specs=pl.BlockSpec((tm, tn), lambda i, j, k: (i, j)),
        scratch_shapes=[pltpu.VMEM((tm, tn), jnp.float32)],
        compiler_params=pltpu.CompilerParams(
            dimension_semantics=("parallel", "parallel", "arbitrary")),
        cost_estimate=cost,
    )(x2d, w_t, b_row)


# ---------------------------------------------------------------------------
# RMSNorm kernel (full feature dim resident per tile)
# ---------------------------------------------------------------------------
def _rmsnorm_kernel(x_ref, g_ref, o_ref, *, eps):
    x = x_ref[...].astype(jnp.float32)
    ms = jnp.mean(x * x, axis=-1, keepdims=True)
    o_ref[...] = (x * jax.lax.rsqrt(ms + eps) * g_ref[...]).astype(o_ref.dtype)


def rmsnorm(x2d, g_row, out_dtype, eps=1e-5):
    M, C = x2d.shape
    tm = _pick_tile(M, (512, 256, 128, 64, 32, 16, 8))
    return pl.pallas_call(
        functools.partial(_rmsnorm_kernel, eps=eps),
        out_shape=jax.ShapeDtypeStruct((M, C), out_dtype),
        grid=(M // tm,),
        in_specs=[pl.BlockSpec((tm, C), lambda i: (i, 0)),
                  pl.BlockSpec((1, C), lambda i: (0, 0))],
        out_specs=pl.BlockSpec((tm, C), lambda i: (i, 0)),
        compiler_params=pltpu.CompilerParams(dimension_semantics=("parallel",)),
    )(x2d, g_row)


# ---------------------------------------------------------------------------
# One-pass RoPE kernel (applied once to Q and K; 1/sqrt(hs) folded into Q)
# Q/K columns are in the per-head-contiguous half-rotated layout.
# ---------------------------------------------------------------------------
def _rope_kernel(q_ref, k_ref, cos_ref, sin_ref, oq_ref, ok_ref, *, n_head, scale):
    C = cos_ref.shape[-1]
    hs = C // n_head
    hh = hs // 2
    cos = cos_ref[...]
    sin = sin_ref[...]

    def rot_half(x):  # per-head rotate-half (static slices; runs once per token)
        parts = []
        for h in range(n_head):
            xh = x[:, h * hs:(h + 1) * hs]
            parts.append(jnp.concatenate([xh[:, hh:], xh[:, :hh]], axis=1))
        return jnp.concatenate(parts, axis=1)

    q = q_ref[0].astype(jnp.float32)
    k = k_ref[0].astype(jnp.float32)
    oq_ref[0] = ((q * cos + rot_half(q) * sin) * scale).astype(oq_ref.dtype)
    ok_ref[0] = (k * cos + rot_half(k) * sin).astype(ok_ref.dtype)


def rope_qk(qkv, cos2, sin2, n_head, scale):
    B, T, C3 = qkv.shape
    C = C3 // 3
    tt = _pick_tile(T, (256, 128, 64, 32, 16, 8))
    kernel = functools.partial(_rope_kernel, n_head=n_head, scale=scale)
    return pl.pallas_call(
        kernel,
        out_shape=(jax.ShapeDtypeStruct((B, T, C), jnp.bfloat16),
                   jax.ShapeDtypeStruct((B, T, C), jnp.bfloat16)),
        grid=(B, T // tt),
        in_specs=[
            pl.BlockSpec((1, tt, C), lambda b, i: (b, i, 0)),  # q slab of qkv
            pl.BlockSpec((1, tt, C), lambda b, i: (b, i, 1)),  # k slab of qkv
            pl.BlockSpec((tt, C), lambda b, i: (i, 0)),
            pl.BlockSpec((tt, C), lambda b, i: (i, 0)),
        ],
        out_specs=(pl.BlockSpec((1, tt, C), lambda b, i: (b, i, 0)),
                   pl.BlockSpec((1, tt, C), lambda b, i: (b, i, 0))),
        compiler_params=pltpu.CompilerParams(
            dimension_semantics=("parallel", "parallel")),
    )(qkv, qkv, cos2, sin2)


# ---------------------------------------------------------------------------
# Flash-style causal attention (RoPE pre-applied, one dot per head, online softmax)
# ---------------------------------------------------------------------------
def _flash_attn_kernel(q_ref, k_ref, v_ref, o_ref, m_sc, l_sc, acc_sc, *, n_head):
    t_q = q_ref.shape[1]
    t_k = k_ref.shape[1]
    C = q_ref.shape[2]
    hs = C // n_head
    i_q = pl.program_id(1)
    i_kv = pl.program_id(2)
    n_kv = pl.num_programs(2)

    @pl.when(i_kv == 0)
    def _init():
        m_sc[...] = jnp.full(m_sc.shape, -1e30, jnp.float32)
        l_sc[...] = jnp.zeros(l_sc.shape, jnp.float32)
        acc_sc[...] = jnp.zeros(acc_sc.shape, jnp.float32)

    # Compute only KV tiles that are (at least partially) causally visible.
    @pl.when(i_kv * t_k <= i_q * t_q + (t_q - 1))
    def _compute():
        q = q_ref[0]                       # (t_q, C) bf16, RoPE'd and pre-scaled
        k = k_ref[0]                       # (t_k, C) bf16, RoPE'd
        v = v_ref[0]                       # (t_k, C) bf16, original head layout

        row = i_q * t_q + jax.lax.broadcasted_iota(jnp.int32, (t_q, t_k), 0)
        col = i_kv * t_k + jax.lax.broadcasted_iota(jnp.int32, (t_q, t_k), 1)
        causal = row >= col

        dims = (((1,), (1,)), ((), ()))
        for h in range(n_head):
            sl = slice(h * hs, (h + 1) * hs)
            s = jax.lax.dot_general(q[:, sl], k[:, sl], dims,
                                    preferred_element_type=jnp.float32)
            s = jnp.where(causal, s, -1e30)

            m_prev = m_sc[h]
            m_new = jnp.maximum(m_prev, jnp.max(s, axis=-1, keepdims=True))
            alpha = jnp.exp(m_prev - m_new)
            p = jnp.exp(s - m_new)          # masked entries underflow to exact 0
            l_sc[h] = alpha * l_sc[h] + jnp.sum(p, axis=-1, keepdims=True)
            acc_sc[:, sl] = alpha * acc_sc[:, sl] + jnp.dot(
                p.astype(jnp.bfloat16), v[:, sl],
                preferred_element_type=jnp.float32)
            m_sc[h] = m_new

    @pl.when(i_kv == n_kv - 1)
    def _finalize():
        for h in range(n_head):
            sl = slice(h * hs, (h + 1) * hs)
            inv_l = pl.reciprocal(l_sc[h], approx=True)
            acc_sc[:, sl] = acc_sc[:, sl] * inv_l
        o_ref[0] = acc_sc[...].astype(o_ref.dtype)


def flash_attention(q_rot, k_rot, qkv, n_head):
    """q_rot/k_rot: (B, T, C) bf16 RoPE'd; qkv: (B, T, 3C) bf16 (V read from it)."""
    B, T, C = q_rot.shape
    t_q = _pick_tile(T, (256, 128, 64, 32, 16, 8))
    t_k = _pick_tile(T, (256, 128, 64, 32, 16, 8))

    def kv_map(last_block):
        def im(b, i, j):
            # clamp to the last causally visible kv tile -> skipped tiles re-use the
            # previous block index and Pallas elides the DMA.
            jj = jnp.minimum(j, (i * t_q + t_q - 1) // t_k)
            return (b, jj, last_block)
        return im

    kernel = functools.partial(_flash_attn_kernel, n_head=n_head)
    cost = pl.CostEstimate(
        flops=4 * B * T * T * C,
        transcendentals=B * T * T * n_head,
        bytes_accessed=(3 * B * T * C + B * T * C) * 2,
    )
    return pl.pallas_call(
        kernel,
        out_shape=jax.ShapeDtypeStruct((B, T, C), jnp.bfloat16),
        grid=(B, T // t_q, T // t_k),
        in_specs=[
            pl.BlockSpec((1, t_q, C), lambda b, i, j: (b, i, 0)),
            pl.BlockSpec((1, t_k, C), kv_map(0)),   # K from k_rot
            pl.BlockSpec((1, t_k, C), kv_map(2)),   # V slab of qkv
        ],
        out_specs=pl.BlockSpec((1, t_q, C), lambda b, i, j: (b, i, 0)),
        scratch_shapes=[
            pltpu.VMEM((n_head, t_q, 1), jnp.float32),   # running max m
            pltpu.VMEM((n_head, t_q, 1), jnp.float32),   # running sum l
            pltpu.VMEM((t_q, C), jnp.float32),           # output accumulator
        ],
        compiler_params=pltpu.CompilerParams(
            dimension_semantics=("parallel", "parallel", "arbitrary")),
        cost_estimate=cost,
    )(q_rot, k_rot, qkv)


# ---------------------------------------------------------------------------
# SwiGLU (lit-llama variant: silu(fc1) * silu(fc2)), halves read from one slab
# ---------------------------------------------------------------------------
def _silu(x):
    return x / (1.0 + jnp.exp(-x))


def _swiglu_kernel(a_ref, b_ref, o_ref):
    a = a_ref[...].astype(jnp.float32)
    b = b_ref[...].astype(jnp.float32)
    o_ref[...] = (_silu(a) * _silu(b)).astype(o_ref.dtype)


def swiglu(h2, H):
    M, N2 = h2.shape
    assert N2 == 2 * H
    tm = _pick_tile(M, (512, 256, 128, 64, 32, 16, 8))
    tn = _pick_tile(H, (512, 256, 128))
    off = H // tn
    return pl.pallas_call(
        _swiglu_kernel,
        out_shape=jax.ShapeDtypeStruct((M, H), jnp.bfloat16),
        grid=(M // tm, H // tn),
        in_specs=[pl.BlockSpec((tm, tn), lambda i, j: (i, j)),
                  pl.BlockSpec((tm, tn), lambda i, j: (i, j + off))],
        out_specs=pl.BlockSpec((tm, tn), lambda i, j: (i, j)),
        compiler_params=pltpu.CompilerParams(
            dimension_semantics=("parallel", "parallel")),
    )(h2, h2)


# ---------------------------------------------------------------------------
# One-time parameter preparation
# ---------------------------------------------------------------------------
def _rope_perm(C, n_head):
    """Per-head de-interleave: within head h, column j<hs/2 <- old 2j, else old 2(j-hs/2)+1."""
    hs = C // n_head
    return jnp.concatenate([
        h * hs + jnp.concatenate([jnp.arange(0, hs, 2), jnp.arange(1, hs, 2)])
        for h in range(n_head)
    ])


def prepare_params(params, n_head):
    C = params["wte"].shape[1]
    perm = _rope_perm(C, n_head)
    layers = []
    for lp in params["layers"]:
        wt = lp["w_attn"].T                                   # (C, 3C)
        w_attn_t = jnp.concatenate(
            [wt[:, :C][:, perm], wt[:, C:2 * C][:, perm], wt[:, 2 * C:]], axis=1)
        b = lp["b_attn"]
        b_attn = jnp.concatenate([b[:C][perm], b[C:2 * C][perm], b[2 * C:]])
        H = lp["w_fc1"].shape[0]
        layers.append(dict(
            rms1=lp["rms1"].reshape(1, C).astype(jnp.float32),
            rms2=lp["rms2"].reshape(1, C).astype(jnp.float32),
            w_attn_t=w_attn_t.astype(jnp.bfloat16),
            b_attn=b_attn.reshape(1, -1).astype(jnp.float32),
            w_proj_t=lp["w_proj"].T.astype(jnp.bfloat16),
            b_proj=lp["b_proj"].reshape(1, -1).astype(jnp.float32),
            w_fc_t=jnp.concatenate([lp["w_fc1"].T, lp["w_fc2"].T],
                                   axis=1).astype(jnp.bfloat16),
            b_fc0=jnp.zeros((1, 2 * H), jnp.float32),
            w_mlpproj_t=lp["w_mlp_proj"].T.astype(jnp.bfloat16),
            b_mlpproj=lp["b_mlp_proj"].reshape(1, -1).astype(jnp.float32),
        ))
    V = params["w_head"].shape[0]
    return dict(
        wte=params["wte"].astype(jnp.float32),
        layers=layers,
        ln_f=params["ln_f"].reshape(1, C).astype(jnp.float32),
        w_head_t=params["w_head"].T.astype(jnp.bfloat16),
        b_head0=jnp.zeros((1, V), jnp.float32),
    )


def build_rope_tables(rope, n_head):
    """(S, hs/2, 2) lit-llama rope cache -> (S, C) cos/sin tables for the
    per-head-contiguous half-rotated layout (rotate-half sign baked into sin)."""
    rc = rope.astype(jnp.float32)
    cos_h, sin_h = rc[..., 0], rc[..., 1]                     # (S, hs/2)
    cos2 = jnp.tile(cos_h, (1, 2 * n_head))                   # (S, C)
    sin2 = jnp.tile(jnp.concatenate([-sin_h, sin_h], axis=1), (1, n_head))
    return cos2, sin2


# ---------------------------------------------------------------------------
# Full LlaMA forward (prefill path).  Residual adds / embedding gather are XLA glue.
# ---------------------------------------------------------------------------
def llama_forward(prep, idx, n_head):
    B, T = idx.shape
    C = prep["wte"].shape[1]
    M = B * T
    hs = C // n_head
    scale = 1.0 / math.sqrt(hs)
    cos2 = prep["cos2"][:T]
    sin2 = prep["sin2"][:T]

    x = jnp.take(prep["wte"], idx, axis=0)                    # (B, T, C) f32 residual

    for lp in prep["layers"]:
        # attention block
        h = rmsnorm(x.reshape(M, C), lp["rms1"], jnp.bfloat16)
        qkv = linear(h, lp["w_attn_t"], lp["b_attn"], jnp.bfloat16).reshape(B, T, 3 * C)
        q_rot, k_rot = rope_qk(qkv, cos2, sin2, n_head, scale)
        y = flash_attention(q_rot, k_rot, qkv, n_head)        # (B, T, C) bf16
        attn_out = linear(y.reshape(M, C), lp["w_proj_t"], lp["b_proj"], jnp.float32)
        x = x + attn_out.reshape(B, T, C)

        # MLP block
        h2 = rmsnorm(x.reshape(M, C), lp["rms2"], jnp.bfloat16)
        H = lp["w_fc_t"].shape[1] // 2
        fc = linear(h2, lp["w_fc_t"], lp["b_fc0"], jnp.bfloat16)      # (M, 2H)
        g = swiglu(fc, H)                                              # (M, H)
        mlp_out = linear(g, lp["w_mlpproj_t"], lp["b_mlpproj"], jnp.float32)
        x = x + mlp_out.reshape(B, T, C)

    xf = rmsnorm(x.reshape(M, C), prep["ln_f"], jnp.bfloat16)
    logits = linear(xf, prep["w_head_t"], prep["b_head0"], jnp.float32)
    return logits.reshape(B, T, -1)


# ---------------------------------------------------------------------------
# Pure-JAX f32 reference (mirrors the PyTorch forward) for correctness check
# ---------------------------------------------------------------------------
def _ref_rmsnorm(x, scale, eps=1e-5):
    ms = jnp.mean(x * x, axis=-1, keepdims=True)
    return scale * (x * jax.lax.rsqrt(ms + eps))


def _ref_apply_rope(x, rope):
    T = x.shape[1]
    rc = rope[:T]
    xs = x.reshape(*x.shape[:-1], -1, 2)
    rc = rc.reshape(1, T, 1, xs.shape[3], 2)
    out = jnp.stack(
        [xs[..., 0] * rc[..., 0] - xs[..., 1] * rc[..., 1],
         xs[..., 1] * rc[..., 0] + xs[..., 0] * rc[..., 1]], axis=-1)
    return out.reshape(x.shape)


def _ref_attention(lp, x, rope, n_head):
    B, T, C = x.shape
    hs = C // n_head
    qkv = x @ lp["w_attn"].T + lp["b_attn"]
    q, k, v = jnp.split(qkv, 3, axis=2)
    q = _ref_apply_rope(q.reshape(B, T, n_head, hs), rope).transpose(0, 2, 1, 3)
    k = _ref_apply_rope(k.reshape(B, T, n_head, hs), rope).transpose(0, 2, 1, 3)
    v = v.reshape(B, T, n_head, hs).transpose(0, 2, 1, 3)
    s = jnp.einsum("bhqd,bhkd->bhqk", q, k) / math.sqrt(hs)
    mask = jnp.tril(jnp.ones((T, T), dtype=jnp.bool_))
    s = jnp.where(mask, s, -jnp.inf)
    p = jax.nn.softmax(s, axis=-1)
    y = jnp.einsum("bhqk,bhkd->bhqd", p, v).transpose(0, 2, 1, 3).reshape(B, T, C)
    return y @ lp["w_proj"].T + lp["b_proj"]


def _ref_mlp(lp, x):
    a = x @ lp["w_fc1"].T
    b = x @ lp["w_fc2"].T
    h = jax.nn.silu(a) * jax.nn.silu(b)
    return h @ lp["w_mlp_proj"].T + lp["b_mlp_proj"]


def ref_llama(params, idx, rope, n_head):
    x = params["wte"][idx]
    for lp in params["layers"]:
        x = x + _ref_attention(lp, _ref_rmsnorm(x, lp["rms1"]), rope, n_head)
        x = x + _ref_mlp(lp, _ref_rmsnorm(x, lp["rms2"]))
    x = _ref_rmsnorm(x, params["ln_f"])
    return x @ params["w_head"].T


# ---------------------------------------------------------------------------
if __name__ == "__main__":
    # "baby_llama"-like small config
    n_layer, n_head, n_embd, block_size, vocab = 2, 8, 128, 16, 100
    padded_vocab = find_multiple(vocab, 64)                    # 128
    head_size = n_embd // n_head
    hidden = find_multiple(int(2 * (4 * n_embd) / 3), 256)     # 512
    B, T = 2, 16

    key = jax.random.PRNGKey(0)
    keys = iter(jax.random.split(key, 40))

    def nrm(shape, std=0.02):
        return std * jax.random.normal(next(keys), shape, jnp.float32)

    layers = []
    for _ in range(n_layer):
        layers.append(dict(
            rms1=1.0 + 0.1 * jax.random.normal(next(keys), (n_embd,), jnp.float32),
            w_attn=nrm((3 * n_embd, n_embd)),
            b_attn=nrm((3 * n_embd,)),
            w_proj=nrm((n_embd, n_embd)),
            b_proj=nrm((n_embd,)),
            rms2=1.0 + 0.1 * jax.random.normal(next(keys), (n_embd,), jnp.float32),
            w_fc1=nrm((hidden, n_embd)),
            w_fc2=nrm((hidden, n_embd)),
            w_mlp_proj=nrm((n_embd, hidden)),
            b_mlp_proj=nrm((n_embd,)),
        ))
    params = dict(
        wte=nrm((padded_vocab, n_embd)),
        layers=layers,
        ln_f=1.0 + 0.1 * jax.random.normal(next(keys), (n_embd,), jnp.float32),
        w_head=nrm((padded_vocab, n_embd)),
    )
    idx = jax.random.randint(next(keys), (B, T), 0, vocab)

    # RoPE cache (block_size, hs//2, 2), lit-llama construction
    theta = 1.0 / (10000.0 ** (jnp.arange(0, head_size, 2, dtype=jnp.float32) / head_size))
    idx_theta = jnp.outer(jnp.arange(block_size, dtype=jnp.float32), theta)
    rope = jnp.stack([jnp.cos(idx_theta), jnp.sin(idx_theta)], axis=-1)

    prep = prepare_params(params, n_head)
    cos2, sin2 = build_rope_tables(rope, n_head)
    prep["cos2"], prep["sin2"] = cos2, sin2

    logits = llama_forward(prep, idx, n_head)
    logits = jax.block_until_ready(logits)

    ref = ref_llama(params, idx, rope, n_head)
    max_err = float(jnp.max(jnp.abs(logits - ref)))
    assert jnp.allclose(logits, ref, atol=3e-2, rtol=3e-2), f"max abs err {max_err}"
    print("KERNEL_OK")
</pallas_src>

<mosaic_0001>
module attributes {stable_mosaic.version = 11 : i64} {
  func.func @_rmsnorm_kernel(%arg0: i32, %arg1: memref<32x128xf32, #tpu.memory_space<vmem>>, %arg2: memref<1x128xf32, #tpu.memory_space<vmem>>, %arg3: memref<32x128xbf16, #tpu.memory_space<vmem>>) attributes {dimension_semantics = [#tpu.dimension_semantics<parallel>], iteration_bounds = array<i64: 1>, scalar_prefetch = 0 : i64, scratch_operands = 0 : i64, tpu.core_type = #tpu.core_type<tc>, window_params = [{transform_indices = @transform_0, window_bounds = array<i64: 32, 128>}, {pipeline_mode = #tpu.pipeline_mode<synchronous>, transform_indices = @transform_1, window_bounds = array<i64: 1, 128>}, {transform_indices = @transform_2, window_bounds = array<i64: 32, 128>}]} {
    %c0 = arith.constant 0 : index
    %c0_0 = arith.constant 0 : index
    %0 = vector.load %arg1[%c0, %c0_0] : memref<32x128xf32, #tpu.memory_space<vmem>>, vector<32x128xf32>
    %1 = arith.mulf %0, %0 : vector<32x128xf32>
    %cst = arith.constant dense<0.000000e+00> : vector<32xf32>
    %2 = vector.multi_reduction <add>, %1, %cst [1] : vector<32x128xf32> to vector<32xf32>
    %3 = vector.shape_cast %2 : vector<32xf32> to vector<32x1xf32>
    %cst_1 = arith.constant 1.280000e+02 : f32
    %4 = vector.broadcast %cst_1 : f32 to vector<32x1xf32>
    %5 = arith.divf %3, %4 : vector<32x1xf32>
    %cst_2 = arith.constant 9.99999974E-6 : f32
    %6 = vector.broadcast %cst_2 : f32 to vector<32x1xf32>
    %7 = arith.addf %5, %6 : vector<32x1xf32>
    %8 = math.rsqrt %7 : vector<32x1xf32>
    %9 = vector.broadcast %8 : vector<32x1xf32> to vector<32x128xf32>
    %10 = arith.mulf %0, %9 : vector<32x128xf32>
    %c0_3 = arith.constant 0 : index
    %c0_4 = arith.constant 0 : index
    %11 = vector.load %arg2[%c0_3, %c0_4] : memref<1x128xf32, #tpu.memory_space<vmem>>, vector<1x128xf32>
    %12 = vector.broadcast %11 : vector<1x128xf32> to vector<32x128xf32>
    %13 = arith.mulf %10, %12 : vector<32x128xf32>
    %14 = arith.truncf %13 : vector<32x128xf32> to vector<32x128xbf16>
    %c0_5 = arith.constant 0 : index
    %c0_6 = arith.constant 0 : index
    %15 = vector.load %arg3[%c0_5, %c0_6] : memref<32x128xbf16, #tpu.memory_space<vmem>>, vector<32x128xbf16>
    tpu.vector_store %arg3[%c0_5, %c0_6], %14 {strides = array<i32>} : memref<32x128xbf16, #tpu.memory_space<vmem>>, vector<32x128xbf16>,
    return
  }
  func.func @transform_0(%arg0: i32) -> (i32, i32) {
    %c0_i32 = arith.constant 0 : i32
    %c0_i32_0 = arith.constant 0 : i32
    return %arg0, %c0_i32 : i32, i32
  }
  func.func @transform_1(%arg0: i32) -> (i32, i32) {
    %c0_i32 = arith.constant 0 : i32
    %c0_i32_0 = arith.constant 0 : i32
    %c0_i32_1 = arith.constant 0 : i32
    return %c0_i32, %c0_i32_0 : i32, i32
  }
  func.func @transform_2(%arg0: i32) -> (i32, i32) {
    %c0_i32 = arith.constant 0 : i32
    %c0_i32_0 = arith.constant 0 : i32
    return %arg0, %c0_i32 : i32, i32
  }
}

</mosaic_0001>

<llo_original>
// kernel: tpu_custom_call.1
$region0: #{tpu_custom_call.1}
  #allocation0 [shape = 'u32[]', space=smem, size = 0x4, offset = 0x4, fixed_abs, tag = 'smem constant byte address 0x4 - core index']
  #allocation1 [shape = 'u32[144,128]{1,0:T(1,128)}', space=vmem, size = 0x12000, scoped, tag = 'internal scratch']
  %s0 = inlined_call_operand.hbm [shape: f32[32,128], index: 0, kind: input, shape index: {}]
  %s1 = inlined_call_operand.vmem [shape: f32[1,128], index: 1, kind: input, shape index: {}]
  %s2 = inlined_call_operand.hbm [shape: bf16[32,128], index: 2, kind: output, shape index: {}]
  %s3 = sld [smem:[#allocation0]]
  $region22: #{tpu_custom_call.1} parent=0
    _
  %s5 = ssub.s32 1, %s3
  %s6 = scalar_select 0, %s5, %s3
  $region1: #{tpu_custom_call.1} parent=0
    #allocation2 [shape = 'u8[16384]{0}', space=vmem, size = 0x4000, scoped, tag = 'input window, operand 0, single buffered']
    #allocation3 [shape = 's32[1]{0}', space=sflag, size = 0x4, scoped, tag = 'scoped memory for tpu_custom_call.1']
    #allocation4 [shape = 's32[1]{0}', space=sflag, size = 0x4, scoped, tag = 'scoped memory for tpu_custom_call.1']
    #allocation5 [shape = 'u8[8192]{0}', space=vmem, size = 0x2000, scoped, tag = 'output window, operand 0, single buffered']
    %7 = vsyncpa [#allocation3], 0
    %8 = vsyncpa [#allocation4], 0
    // Predicated region
    $region2: #{tpu_custom_call.1} parent=1 // pred_check
      _
    $region3: #{tpu_custom_call.1} parent=1 // pred_check_branch
      %10 = sbr.rel (0) target = $region5
    $region4: #{tpu_custom_call.1} parent=1 // pred_region
      %s12 = ssub.s32 512, 512
      %13 = vsyncadd [#allocation3], %s12
      %s14 = sshll.u32 [#allocation2], 4
      %s15 = int_to_ptr.vmem [resolvable:$true] %s14
      %20 = dma.hbm_to_vmem [thread:$0]  %s0, 512, %s15, [#allocation3], 128, 128, 8
    $region5: #{tpu_custom_call.1} parent=1 // pred_fallthru
      _
    // Predicated region
    $region6: #{tpu_custom_call.1} parent=1 // pred_check
      _
    $region7: #{tpu_custom_call.1} parent=1 // pred_check_branch
      %22 = sbr.rel (0) target = $region9
    $region8: #{tpu_custom_call.1} parent=1 // pred_region
      _
    $region9: #{tpu_custom_call.1} parent=1 // pred_fallthru
      _
    // Predicated region
    $region10: #{tpu_custom_call.1} parent=1 // pred_check
      _
    $region11: #{tpu_custom_call.1} parent=1 // pred_check_branch
      %24 = sbr.rel (0) target = $region13
    $region12: #{tpu_custom_call.1} parent=1 // pred_region
      %25 = dma.done [#allocation3], 512
    $region13: #{tpu_custom_call.1} parent=1 // pred_fallthru
      _
    %v26 = vld [vmem:[#allocation2] sm:$0xff]
    %v27 = vld [vmem:[#allocation2 + $0x8] sm:$0xff]
    %v28 = vld [vmem:[#allocation2 + $0x10] sm:$0xff]
    %v29 = vld [vmem:[#allocation2 + $0x18] sm:$0xff]
    %v30 = vmul.f32 %v26, %v26
    %v31 = vmul.f32 %v27, %v27
    %v32 = vmul.f32 %v28, %v28
    %v33 = vmul.f32 %v29, %v29
    %34 = vadd.xlane.f32.xlu0 %v30
    %v35 = vpop.xlane.xlu0 %34
    %36 = vadd.xlane.f32.xlu0 %v31
    %v37 = vpop.xlane.xlu0 %36
    %38 = vadd.xlane.f32.xlu0 %v32
    %v39 = vpop.xlane.xlu0 %38
    %40 = vadd.xlane.f32.xlu0 %v33
    %v41 = vpop.xlane.xlu0 %40
    %v42 = vrcp.pop 128.0
    %v43 = vmul.f32 %v35, %v42
    %v44 = vmul.f32 %v37, %v42
    %v45 = vmul.f32 %v39, %v42
    %v46 = vmul.f32 %v41, %v42
    %v47 = vadd.f32 %v43, 1e-05
    %v48 = vadd.f32 %v44, 1e-05
    %v49 = vadd.f32 %v45, 1e-05
    %v50 = vadd.f32 %v46, 1e-05
    %v51 = vrsqrt.pop %v47
    %v52 = vrsqrt.pop %v48
    %v53 = vrsqrt.pop %v49
    %v54 = vrsqrt.pop %v50
    %v55 = vmul.f32 %v26, %v51
    %v56 = vmul.f32 %v27, %v52
    %v57 = vmul.f32 %v28, %v53
    %v58 = vmul.f32 %v29, %v54
    %v59 = vld [vmem:[%s1] sm:$0x1]
    %v61 = vlaneseq
    %v62 = vshrl.u32 %v61, 7
    %v63 = vsub.s32 0, %v62
    %v64 = vrot.slane %v59, %v63
    %v66 = vmul.f32 %v55, %v64
    %v67 = vmul.f32 %v56, %v64
    %v68 = vmul.f32 %v57, %v64
    %v69 = vmul.f32 %v58, %v64
    %v70 = vpack.c.bf16 %v67, %v66
    %v71 = vpack.c.bf16 %v69, %v68
    %v74 = vunpack.c.l.b16 %v70
    %v75 = vunpack.c.h.b16 %v70
    %v76 = vunpack.c.l.b16 %v71
    %v77 = vunpack.c.h.b16 %v71
    %v78 = vpack.c.b16 %v74, %v74
    %v79 = vpack.c.b16 %v75, %v75
    %v80 = vpack.c.b16 %v76, %v76
    %v81 = vpack.c.b16 %v77, %v77
    %86 = vst [vmem:[#allocation5] sm:$0xf] %v78
    %87 = vst [vmem:[#allocation5 + $0x4] sm:$0xf] %v79
    %88 = vst [vmem:[#allocation5 + $0x8] sm:$0xf] %v80
    %89 = vst [vmem:[#allocation5 + $0xc] sm:$0xf] %v81
    // Predicated region
    $region14: #{tpu_custom_call.1} parent=1 // pred_check
      _
    $region15: #{tpu_custom_call.1} parent=1 // pred_check_branch
      %91 = sbr.rel (0) target = $region17
    $region16: #{tpu_custom_call.1} parent=1 // pred_region
      %s93 = ssub.s32 256, 256
      %94 = vsyncadd [#allocation4], %s93
      %s95 = sshll.u32 [#allocation5], 4
      %s96 = int_to_ptr.vmem [resolvable:$true] %s95
      %101 = dma.vmem_to_hbm [thread:$0]  %s96, 256, %s2, [#allocation4], 64, 64, 4
    $region17: #{tpu_custom_call.1} parent=1 // pred_fallthru
      _
    // Predicated region
    $region18: #{tpu_custom_call.1} parent=1 // pred_check
      _
    $region19: #{tpu_custom_call.1} parent=1 // pred_check_branch
      %103 = sbr.rel (0) target = $region21
    $region20: #{tpu_custom_call.1} parent=1 // pred_region
      %104 = dma.done [#allocation4], 256
    $region21: #{tpu_custom_call.1} parent=1 // pred_fallthru
      _
    %105 = vsyncpa [#allocation3], 1
    %106 = vsyncpa [#allocation4], 1

</llo_original>
